<compile_context>
chip_gen: v7x
topology: tpu7x:2x2x1
jax: 0.10.0
libtpu: 0.0.40
codegen_flags: <defaults>
</compile_context>

<pallas_src>
import jax
import jax.numpy as jnp
from jax.experimental import pallas as pl
from jax.experimental.pallas import tpu as pltpu
from functools import partial


def _layernorm_kernel(x_ref, g_ref, b_ref, o_ref, *, eps, feat):
    # x_ref: (TR, H) tile ; g_ref/b_ref: (1, H)
    x = x_ref[...].astype(jnp.float32)
    mean = jnp.mean(x, axis=-1, keepdims=True)
    # torch.var default is unbiased (Bessel correction): divide by N-1.
    # Precomputed constant multiply instead of a runtime divide.
    inv_nm1 = jnp.float32(1.0 / max(feat - 1, 1))
    var = jnp.sum(jnp.square(x - mean), axis=-1, keepdims=True) * inv_nm1
    # Per-row reciprocal (TR elements, EUP slot) instead of a per-element divide.
    inv = pl.reciprocal(jnp.sqrt(var) + jnp.float32(eps), approx=False)
    gamma = g_ref[...].astype(jnp.float32)
    beta = b_ref[...].astype(jnp.float32)
    # Recompute (x - mean) here instead of reusing a tile-sized temp that would
    # stay live across the variance reduction (avoids a spilled full-tile store).
    o_ref[...] = (gamma * ((x - mean) * inv) + beta).astype(o_ref.dtype)


def _round8_down(n):
    return (n // 8) * 8


def _vmem_capacity_bytes():
    # Generation-aware VMEM capacity (v5e/v6e: 128 MiB, v7x: 64 MiB per TC).
    try:
        cap = getattr(pltpu.get_tpu_info(), "vmem_capacity_bytes", None)
        if cap:
            return int(cap)
    except Exception:
        pass
    return 64 << 20  # conservative fallback (fits every generation)


def layer_norm(x, gamma, beta, eps=1e-6, tile_rows=None):
    """x: (..., H); gamma/beta: (H,). Returns same shape/dtype as x."""
    orig_shape = x.shape
    feat = orig_shape[-1]
    x2d = x.reshape(-1, feat)
    rows = x2d.shape[0]
    itemsize = jnp.dtype(x.dtype).itemsize

    # ---- VMEM budget (generation-aware) ------------------------------------
    vmem_cap = _vmem_capacity_bytes()
    tile_budget = int(0.55 * vmem_cap)     # budget for per-tile buffers
    # Per-row footprint: double-buffered in + out tiles (4x io) + ~2 f32 temps.
    bytes_per_row = feat * (4 * itemsize + 2 * 4)

    # ---- Tile-size selection: large, 8-aligned row tiles -------------------
    MIN_STEPS = 4
    if rows < 8:
        # Single full-extent block (exempt from the multiple-of-8 constraint).
        tr = rows
    else:
        if tile_rows is None:
            # Target ~4 MiB of f32 working set per tile (amortizes the ~0.35 us
            # per-grid-step cost), e.g. H=4096 -> tr=256, H=1024 -> tr=1024.
            target = (4 << 20) // max(1, feat * 4)
            tr = max(8, min(4096, _round8_down(target)))
        else:
            tr = max(8, _round8_down(int(tile_rows)))
        # Clamp so the real footprint fits the declared VMEM limit on every
        # generation (a hand-passed tile_rows that fits v6e could OOM v7x).
        tr = min(tr, max(8, _round8_down(tile_budget // max(1, bytes_per_row))))
        # Ensure a few pipeline steps (overlap) and real megacore sharding on
        # v7x whenever the problem is big enough.
        if rows >= 8 * MIN_STEPS:
            tr = min(tr, max(8, _round8_down(rows // MIN_STEPS)))
        # Never exceed the row extent (keeps tr a multiple of 8; a partial last
        # block handles the remainder).
        tr = min(tr, _round8_down(rows))

    grid = (pl.cdiv(rows, tr),)

    g2d = gamma.reshape(1, feat)
    b2d = beta.reshape(1, feat)

    # Declared VMEM limit: real footprint + headroom, capped below capacity.
    est = tr * bytes_per_row + 4 * feat * 4 + (2 << 20)
    vmem_limit = int(min(max(est, 8 << 20), int(0.75 * vmem_cap)))

    kernel = partial(_layernorm_kernel, eps=float(eps), feat=feat)

    out = pl.pallas_call(
        kernel,
        out_shape=jax.ShapeDtypeStruct((rows, feat), x.dtype),
        grid_spec=pltpu.PrefetchScalarGridSpec(
            num_scalar_prefetch=0,
            grid=grid,
            in_specs=[
                pl.BlockSpec((tr, feat), lambda i: (i, 0)),   # x rows tile
                pl.BlockSpec((1, feat), lambda i: (0, 0)),    # gamma (broadcast)
                pl.BlockSpec((1, feat), lambda i: (0, 0)),    # beta  (broadcast)
            ],
            out_specs=pl.BlockSpec((tr, feat), lambda i: (i, 0)),
        ),
        compiler_params=pltpu.CompilerParams(
            dimension_semantics=("parallel",),   # shards row tiles across TCs on v7x
            vmem_limit_bytes=vmem_limit,
        ),
    )(x2d, g2d, b2d)

    return out.reshape(orig_shape)


def _reference(x, gamma, beta, eps):
    # Plain-JAX reference: unbiased var, eps OUTSIDE sqrt (matches Normalize.py).
    feat = x.shape[-1]
    mean = jnp.mean(x, axis=-1, keepdims=True)
    var = jnp.sum((x - mean) ** 2, axis=-1, keepdims=True) / max(feat - 1, 1)
    return gamma * (x - mean) / (jnp.sqrt(var) + eps) + beta


if __name__ == "__main__":
    key = jax.random.PRNGKey(0)
    eps = 1e-6

    # Main small example consistent with the module: (batch=2, seq=8, hidden=32).
    batch, seq, hidden = 2, 8, 32
    x = jax.random.normal(key, (batch, seq, hidden), dtype=jnp.float32)
    gamma = jnp.ones((hidden,), dtype=jnp.float32)   # nn.Parameter(torch.ones)
    beta = jnp.zeros((hidden,), dtype=jnp.float32)   # nn.Parameter(torch.zeros)

    y = layer_norm(x, gamma, beta, eps=eps)
    jax.block_until_ready(y)
    assert jnp.allclose(y, _reference(x, gamma, beta, eps), atol=1e-5, rtol=1e-5), \
        "mismatch vs reference"

    # Extra check: rows not divisible by the tile -> exercises the partial
    # last block (masked writes, no pad/slice in the wrapper).
    key2 = jax.random.PRNGKey(0)
    h2 = 160
    x2 = jax.random.normal(key2, (3, 7, h2), dtype=jnp.float32)   # rows=21
    g2 = jnp.ones((h2,), dtype=jnp.float32)
    b2 = jnp.zeros((h2,), dtype=jnp.float32)
    y2 = layer_norm(x2, g2, b2, eps=eps)
    jax.block_until_ready(y2)
    assert jnp.allclose(y2, _reference(x2, g2, b2, eps), atol=1e-5, rtol=1e-5), \
        "mismatch vs reference (partial block)"

    print("KERNEL_OK")
</pallas_src>

<mosaic_0001>
module attributes {stable_mosaic.version = 11 : i64} {
  func.func @_layernorm_kernel(%arg0: i32, %arg1: memref<16x32xf32, #tpu.memory_space<vmem>>, %arg2: memref<1x32xf32, #tpu.memory_space<vmem>>, %arg3: memref<1x32xf32, #tpu.memory_space<vmem>>, %arg4: memref<16x32xf32, #tpu.memory_space<vmem>>) attributes {dimension_semantics = [#tpu.dimension_semantics<parallel>], iteration_bounds = array<i64: 1>, scalar_prefetch = 0 : i64, scratch_operands = 0 : i64, tpu.core_type = #tpu.core_type<tc>, window_params = [{transform_indices = @transform_0, window_bounds = array<i64: 16, 32>}, {pipeline_mode = #tpu.pipeline_mode<synchronous>, transform_indices = @transform_1, window_bounds = array<i64: 1, 32>}, {pipeline_mode = #tpu.pipeline_mode<synchronous>, transform_indices = @transform_2, window_bounds = array<i64: 1, 32>}, {transform_indices = @transform_3, window_bounds = array<i64: 16, 32>}]} {
    %c0 = arith.constant 0 : index
    %c0_0 = arith.constant 0 : index
    %0 = vector.load %arg1[%c0, %c0_0] : memref<16x32xf32, #tpu.memory_space<vmem>>, vector<16x32xf32>
    %cst = arith.constant dense<0.000000e+00> : vector<16xf32>
    %1 = vector.multi_reduction <add>, %0, %cst [1] : vector<16x32xf32> to vector<16xf32>
    %2 = vector.shape_cast %1 : vector<16xf32> to vector<16x1xf32>
    %cst_1 = arith.constant 3.200000e+01 : f32
    %3 = vector.broadcast %cst_1 : f32 to vector<16x1xf32>
    %4 = arith.divf %2, %3 : vector<16x1xf32>
    %5 = vector.broadcast %4 : vector<16x1xf32> to vector<16x32xf32>
    %6 = arith.subf %0, %5 : vector<16x32xf32>
    %7 = arith.mulf %6, %6 : vector<16x32xf32>
    %cst_2 = arith.constant dense<0.000000e+00> : vector<16xf32>
    %8 = vector.multi_reduction <add>, %7, %cst_2 [1] : vector<16x32xf32> to vector<16xf32>
    %9 = vector.shape_cast %8 : vector<16xf32> to vector<16x1xf32>
    %cst_3 = arith.constant 0.0322580636 : f32
    %10 = vector.broadcast %cst_3 : f32 to vector<16x1xf32>
    %11 = arith.mulf %9, %10 : vector<16x1xf32>
    %12 = math.sqrt %11 : vector<16x1xf32>
    %cst_4 = arith.constant 9.99999997E-7 : f32
    %13 = vector.broadcast %cst_4 : f32 to vector<16x1xf32>
    %14 = arith.addf %12, %13 : vector<16x1xf32>
    %15 = tpu.reciprocal %14 : vector<16x1xf32> -> vector<16x1xf32>
    %c0_5 = arith.constant 0 : index
    %c0_6 = arith.constant 0 : index
    %16 = vector.load %arg2[%c0_5, %c0_6] : memref<1x32xf32, #tpu.memory_space<vmem>>, vector<1x32xf32>
    %c0_7 = arith.constant 0 : index
    %c0_8 = arith.constant 0 : index
    %17 = vector.load %arg3[%c0_7, %c0_8] : memref<1x32xf32, #tpu.memory_space<vmem>>, vector<1x32xf32>
    %18 = vector.broadcast %4 : vector<16x1xf32> to vector<16x32xf32>
    %19 = arith.subf %0, %18 : vector<16x32xf32>
    %20 = vector.broadcast %15 : vector<16x1xf32> to vector<16x32xf32>
    %21 = arith.mulf %19, %20 : vector<16x32xf32>
    %22 = vector.broadcast %16 : vector<1x32xf32> to vector<16x32xf32>
    %23 = arith.mulf %22, %21 : vector<16x32xf32>
    %24 = vector.broadcast %17 : vector<1x32xf32> to vector<16x32xf32>
    %25 = arith.addf %23, %24 : vector<16x32xf32>
    %c0_9 = arith.constant 0 : index
    %c0_10 = arith.constant 0 : index
    %26 = vector.load %arg4[%c0_9, %c0_10] : memref<16x32xf32, #tpu.memory_space<vmem>>, vector<16x32xf32>
    tpu.vector_store %arg4[%c0_9, %c0_10], %25 {strides = array<i32>} : memref<16x32xf32, #tpu.memory_space<vmem>>, vector<16x32xf32>,
    return
  }
  func.func @transform_0(%arg0: i32) -> (i32, i32) {
    %c0_i32 = arith.constant 0 : i32
    %c0_i32_0 = arith.constant 0 : i32
    return %arg0, %c0_i32 : i32, i32
  }
  func.func @transform_1(%arg0: i32) -> (i32, i32) {
    %c0_i32 = arith.constant 0 : i32
    %c0_i32_0 = arith.constant 0 : i32
    %c0_i32_1 = arith.constant 0 : i32
    return %c0_i32, %c0_i32_0 : i32, i32
  }
  func.func @transform_2(%arg0: i32) -> (i32, i32) {
    %c0_i32 = arith.constant 0 : i32
    %c0_i32_0 = arith.constant 0 : i32
    %c0_i32_1 = arith.constant 0 : i32
    return %c0_i32, %c0_i32_0 : i32, i32
  }
  func.func @transform_3(%arg0: i32) -> (i32, i32) {
    %c0_i32 = arith.constant 0 : i32
    %c0_i32_0 = arith.constant 0 : i32
    return %arg0, %c0_i32 : i32, i32
  }
}

</mosaic_0001>

<llo_original>
// kernel: tpu_custom_call.1
$region0: #{tpu_custom_call.1}
  #allocation0 [shape = 'u32[]', space=smem, size = 0x4, offset = 0x4, fixed_abs, tag = 'smem constant byte address 0x4 - core index']
  #allocation1 [shape = 'u32[144,128]{1,0:T(1,128)}', space=vmem, size = 0x12000, scoped, tag = 'internal scratch']
  %s0 = inlined_call_operand.hbm [shape: f32[16,32], index: 0, kind: input, shape index: {}]
  %s1 = inlined_call_operand.vmem [shape: f32[1,32], index: 1, kind: input, shape index: {}]
  %s2 = inlined_call_operand.vmem [shape: f32[1,32], index: 2, kind: input, shape index: {}]
  %s3 = inlined_call_operand.hbm [shape: f32[16,32], index: 3, kind: output, shape index: {}]
  %s4 = sld [smem:[#allocation0]]
  $region26: #{tpu_custom_call.1} parent=0
    _
  %s6 = ssub.s32 1, %s4
  %s7 = scalar_select 0, %s6, %s4
  $region1: #{tpu_custom_call.1} parent=0
    #allocation2 [shape = 'u8[8192]{0}', space=vmem, size = 0x2000, scoped, tag = 'input window, operand 0, single buffered']
    #allocation3 [shape = 's32[1]{0}', space=sflag, size = 0x4, scoped, tag = 'scoped memory for tpu_custom_call.1']
    #allocation4 [shape = 's32[1]{0}', space=sflag, size = 0x4, scoped, tag = 'scoped memory for tpu_custom_call.1']
    #allocation5 [shape = 'u8[8192]{0}', space=vmem, size = 0x2000, scoped, tag = 'output window, operand 0, single buffered']
    %8 = vsyncpa [#allocation3], 0
    %9 = vsyncpa [#allocation4], 0
    // Predicated region
    $region2: #{tpu_custom_call.1} parent=1 // pred_check
      _
    $region3: #{tpu_custom_call.1} parent=1 // pred_check_branch
      %11 = sbr.rel (0) target = $region5
    $region4: #{tpu_custom_call.1} parent=1 // pred_region
      %s13 = ssub.s32 256, 256
      %14 = vsyncadd [#allocation3], %s13
      %s15 = sshll.u32 [#allocation2], 4
      %s16 = int_to_ptr.vmem [resolvable:$true] %s15
      %21 = dma.hbm_to_vmem [thread:$0]  %s0, 256, %s16, [#allocation3], 128, 128, 8
    $region5: #{tpu_custom_call.1} parent=1 // pred_fallthru
      _
    // Predicated region
    $region6: #{tpu_custom_call.1} parent=1 // pred_check
      _
    $region7: #{tpu_custom_call.1} parent=1 // pred_check_branch
      %23 = sbr.rel (0) target = $region9
    $region8: #{tpu_custom_call.1} parent=1 // pred_region
      _
    $region9: #{tpu_custom_call.1} parent=1 // pred_fallthru
      _
    // Predicated region
    $region10: #{tpu_custom_call.1} parent=1 // pred_check
      _
    $region11: #{tpu_custom_call.1} parent=1 // pred_check_branch
      %25 = sbr.rel (0) target = $region13
    $region12: #{tpu_custom_call.1} parent=1 // pred_region
      _
    $region13: #{tpu_custom_call.1} parent=1 // pred_fallthru
      _
    // Predicated region
    $region14: #{tpu_custom_call.1} parent=1 // pred_check
      _
    $region15: #{tpu_custom_call.1} parent=1 // pred_check_branch
      %27 = sbr.rel (0) target = $region17
    $region16: #{tpu_custom_call.1} parent=1 // pred_region
      %28 = dma.done [#allocation3], 256
    $region17: #{tpu_custom_call.1} parent=1 // pred_fallthru
      _
    %v29 = vld [vmem:[#allocation2] sm:$0xff]
    %v30 = vld [vmem:[#allocation2 + $0x8] sm:$0xff]
    %vm31 = vcmask 261120
    %v32 = vsel %vm31, %v29, 0.0
    %33 = vadd.xlane.f32.xlu0 %v32
    %v34 = vpop.xlane.xlu0 %33
    %v35 = vsel %vm31, %v30, 0.0
    %36 = vadd.xlane.f32.xlu0 %v35
    %v37 = vpop.xlane.xlu0 %36
    %v38 = vrcp.pop 32.0
    %v39 = vmul.f32 %v34, %v38
    %v40 = vmul.f32 %v37, %v38
    %v41 = vsub.f32 %v29, %v39
    %v42 = vsub.f32 %v30, %v40
    %v43 = vmul.f32 %v41, %v41
    %v44 = vmul.f32 %v42, %v42
    %v45 = vsel %vm31, %v43, 0.0
    %46 = vadd.xlane.f32.xlu0 %v45
    %v47 = vpop.xlane.xlu0 %46
    %v48 = vsel %vm31, %v44, 0.0
    %49 = vadd.xlane.f32.xlu0 %v48
    %v50 = vpop.xlane.xlu0 %49
    %v51 = vmul.f32 %v47, 0.032258064
    %v52 = vmul.f32 %v50, 0.032258064
    %v53 = vrsqrt.pop %v51
    %v54 = vmul.f32 %v51, %v53
    %vm55 = vcmp.eq.f32.partialorder %v51, inf
    %v56 = vsel %vm55, %v51, %v54
    %vm57 = vcmp.eq.f32.partialorder %v51, 0.0
    %v58 = vand.u32 %v51, 2147483648
    %v59 = vsel %vm57, %v58, %v56
    %v60 = vrsqrt.pop %v52
    %v61 = vmul.f32 %v52, %v60
    %vm62 = vcmp.eq.f32.partialorder %v52, inf
    %v63 = vsel %vm62, %v52, %v61
    %vm64 = vcmp.eq.f32.partialorder %v52, 0.0
    %v65 = vand.u32 %v52, 2147483648
    %v66 = vsel %vm64, %v65, %v63
    %v67 = vadd.f32 %v59, 1e-06
    %v68 = vadd.f32 %v66, 1e-06
    %v69 = vrcp.pop %v67
    %v70 = vrcp.pop %v68
    %v71 = vld [vmem:[%s1] sm:$0x1]
    %v72 = vld [vmem:[%s2] sm:$0x1]
    %v73 = vmul.f32 %v41, %v69
    %v74 = vmul.f32 %v42, %v70
    %v76 = vlaneseq
    %v77 = vshrl.u32 %v76, 7
    %v78 = vsub.s32 0, %v77
    %v79 = vrot.slane %v71, %v78
    %v81 = vmul.f32 %v79, %v73
    %v82 = vmul.f32 %v79, %v74
    %v84 = vlaneseq
    %v85 = vshrl.u32 %v84, 7
    %v86 = vsub.s32 0, %v85
    %v87 = vrot.slane %v72, %v86
    %v89 = vadd.f32 %v81, %v87
    %v90 = vadd.f32 %v82, %v87
    %91 = vst.msk [vmem:[#allocation5] sm:$0xff] %vm31, %v89
    %92 = vst.msk [vmem:[#allocation5 + $0x8] sm:$0xff] %vm31, %v90
    // Predicated region
    $region18: #{tpu_custom_call.1} parent=1 // pred_check
      _
    $region19: #{tpu_custom_call.1} parent=1 // pred_check_branch
      %94 = sbr.rel (0) target = $region21
    $region20: #{tpu_custom_call.1} parent=1 // pred_region
      %s96 = ssub.s32 256, 256
      %97 = vsyncadd [#allocation4], %s96
      %s98 = sshll.u32 [#allocation5], 4
      %s99 = int_to_ptr.vmem [resolvable:$true] %s98
      %104 = dma.vmem_to_hbm [thread:$0]  %s99, 256, %s3, [#allocation4], 128, 128, 8
    $region21: #{tpu_custom_call.1} parent=1 // pred_fallthru
      _
    // Predicated region
    $region22: #{tpu_custom_call.1} parent=1 // pred_check
      _
    $region23: #{tpu_custom_call.1} parent=1 // pred_check_branch
      %106 = sbr.rel (0) target = $region25
    $region24: #{tpu_custom_call.1} parent=1 // pred_region
      %107 = dma.done [#allocation4], 256
    $region25: #{tpu_custom_call.1} parent=1 // pred_fallthru
      _
    %108 = vsyncpa [#allocation3], 1
    %109 = vsyncpa [#allocation4], 1

</llo_original>
